<compile_context>
chip_gen: v7x
topology: tpu7x:2x2x1
jax: 0.10.0
libtpu: 0.0.40
codegen_flags: <defaults>
</compile_context>

<pallas_src>
import jax
import jax.numpy as jnp
from jax.experimental import pallas as pl
from jax.experimental.pallas import tpu as pltpu


def _concat_pool_kernel(x_ref, out_ref):
    # x_ref: (BLOCK_R, H*W) tile in VMEM, native dtype; reduce over lanes.
    x = x_ref[...]
    hw = x.shape[-1]
    # Max is exact in the native dtype — no cast needed.
    mx = jnp.max(x, axis=-1, keepdims=True).astype(jnp.float32)
    # Mean: f32-accumulated sum (no full-tile f32 temporary), then scale.
    av = jnp.sum(x, axis=-1, dtype=jnp.float32, keepdims=True) * jnp.float32(1.0 / hw)
    # Single (BLOCK_R, 2) output block: col 0 = max, col 1 = avg.
    # TODO(synk): if a v7x bundle dump shows the masked 2-lane stores exposed,
    # switch to a lane-dense (2, rows) output layout and split in the wrapper.
    out_ref[...] = jnp.concatenate([mx, av], axis=-1).astype(out_ref.dtype)


def _round_up(x, m):
    return ((x + m - 1) // m) * m


def _vmem_capacity_bytes():
    """Physical VMEM of the current generation; conservative fallback = v7x."""
    try:
        info = pltpu.get_tpu_info()
        cap = int(getattr(info, "vmem_capacity_bytes", 0))
        if cap > 0:
            return cap
    except Exception:
        pass
    return 64 << 20  # v7x (smallest of v5e/v6e/v7x) — safe everywhere.


def _choose_tiling(rows, hw, dtype):
    """Pick BLOCK_R and a matching vmem_limit_bytes from padded-tile footprints."""
    itemsize = jnp.dtype(dtype).itemsize
    sub = 8 * max(1, 4 // itemsize)          # sublane multiple: 8 f32, 16 bf16, 32 int8
    hw_pad = _round_up(hw, 128)              # lanes pad to 128

    vmem_phys = _vmem_capacity_bytes()

    # Budget for the streaming input: <= ~1/3 of physical VMEM, capped at 40 MiB.
    # Split as 2 double-buffered input tiles + 1 padded tile of headroom for
    # in-kernel temporaries / output buffers.
    budget = min(vmem_phys // 3, 40 << 20)
    per_buf = max(1, budget // 3)

    br = per_buf // max(1, hw_pad * itemsize)
    br = max(sub, (br // sub) * sub)

    # Guarantee multiple grid steps when rows allow (>= ~8), so the "parallel"
    # row axis can be sharded across v7x's two TensorCores.
    steps_cap = max(sub, _round_up(pl.cdiv(rows, 8), sub))
    br = min(br, steps_cap)

    if br >= rows:
        br = rows                            # full extent: always a legal block

    # vmem_limit sized from the PADDED footprint (2x input + f32 headroom + out),
    # with generous margin but never above ~3/4 of physical VMEM.
    br_pad = _round_up(br, sub)
    est = 2 * br_pad * hw_pad * itemsize     # double-buffered input
    est += br_pad * hw_pad * 4               # headroom: reduce temporaries (f32)
    est += 4 * br_pad * 128 * 4              # output buffers (tiny, lane-padded)
    vmem_limit = min(int(vmem_phys * 0.75), max(2 * est, 32 << 20))

    return br, vmem_limit


def adaptive_concat_pool2d(x):
    """Equivalent of AdaptiveConcatPool2d(sz=(1,1)).forward on NCHW input."""
    N, C, H, W = x.shape
    rows = N * C
    hw = H * W
    xf = x.reshape(rows, hw)                 # no dtype cast (fused in-kernel)

    block_r, vmem_limit = _choose_tiling(rows, hw, x.dtype)
    grid = (pl.cdiv(rows, block_r),)

    # TODO(synk): for small spatial heads (hw <= 64, e.g. 7x7) pack k channels
    # per lane row to recover lane utilization; skipped pending measurement.
    out = pl.pallas_call(
        _concat_pool_kernel,
        out_shape=jax.ShapeDtypeStruct((rows, 2), x.dtype),
        grid=grid,
        in_specs=[pl.BlockSpec((block_r, hw), lambda i: (i, 0))],
        out_specs=pl.BlockSpec((block_r, 2), lambda i: (i, 0)),
        compiler_params=pltpu.CompilerParams(
            dimension_semantics=("parallel",),
            vmem_limit_bytes=vmem_limit),
    )(xf)

    mp = out[:, 0].reshape(N, C, 1, 1)
    ap = out[:, 1].reshape(N, C, 1, 1)
    return jnp.concatenate([mp, ap], axis=1)


if __name__ == "__main__":
    key = jax.random.PRNGKey(0)
    x = jax.random.normal(key, (2, 4, 16, 16), dtype=jnp.float32)

    out = adaptive_concat_pool2d(x)
    out = jax.block_until_ready(out)

    # Sanity check against pure-JAX reference (same semantics as PyTorch).
    ref_max = jnp.max(x, axis=(2, 3), keepdims=True)
    ref_avg = jnp.mean(x, axis=(2, 3), keepdims=True)
    ref = jnp.concatenate([ref_max, ref_avg], axis=1)
    assert out.shape == (2, 8, 1, 1), out.shape
    assert jnp.allclose(out, ref, atol=1e-5, rtol=1e-5)

    print("KERNEL_OK")
</pallas_src>

<mosaic_0001>
module attributes {stable_mosaic.version = 11 : i64} {
  func.func @_concat_pool_kernel(%arg0: i32, %arg1: memref<8x256xf32, #tpu.memory_space<vmem>>, %arg2: memref<8x2xf32, #tpu.memory_space<vmem>>) attributes {dimension_semantics = [#tpu.dimension_semantics<parallel>], iteration_bounds = array<i64: 1>, scalar_prefetch = 0 : i64, scratch_operands = 0 : i64, tpu.core_type = #tpu.core_type<tc>, window_params = [{transform_indices = @transform_0, window_bounds = array<i64: 8, 256>}, {transform_indices = @transform_1, window_bounds = array<i64: 8, 2>}]} {
    %c0 = arith.constant 0 : index
    %c0_0 = arith.constant 0 : index
    %0 = vector.load %arg1[%c0, %c0_0] : memref<8x256xf32, #tpu.memory_space<vmem>>, vector<8x256xf32>
    %cst = arith.constant dense<0xFF800000> : vector<8xf32>
    %1 = vector.multi_reduction <maximumf>, %0, %cst [1] : vector<8x256xf32> to vector<8xf32>
    %2 = vector.shape_cast %1 : vector<8xf32> to vector<8x1xf32>
    %cst_1 = arith.constant dense<0.000000e+00> : vector<8xf32>
    %3 = vector.multi_reduction <add>, %0, %cst_1 [1] : vector<8x256xf32> to vector<8xf32>
    %4 = vector.shape_cast %3 : vector<8xf32> to vector<8x1xf32>
    %cst_2 = arith.constant 3.906250e-03 : f32
    %5 = vector.broadcast %cst_2 : f32 to vector<8x1xf32>
    %6 = arith.mulf %4, %5 : vector<8x1xf32>
    %7 = tpu.concatenate %2, %6 in 1 : vector<8x1xf32>, vector<8x1xf32> -> vector<8x2xf32>
    %c0_3 = arith.constant 0 : index
    %c0_4 = arith.constant 0 : index
    %8 = vector.load %arg2[%c0_3, %c0_4] : memref<8x2xf32, #tpu.memory_space<vmem>>, vector<8x2xf32>
    tpu.vector_store %arg2[%c0_3, %c0_4], %7 {strides = array<i32>} : memref<8x2xf32, #tpu.memory_space<vmem>>, vector<8x2xf32>,
    return
  }
  func.func @transform_0(%arg0: i32) -> (i32, i32) {
    %c0_i32 = arith.constant 0 : i32
    %c0_i32_0 = arith.constant 0 : i32
    return %arg0, %c0_i32 : i32, i32
  }
  func.func @transform_1(%arg0: i32) -> (i32, i32) {
    %c0_i32 = arith.constant 0 : i32
    %c0_i32_0 = arith.constant 0 : i32
    return %arg0, %c0_i32 : i32, i32
  }
}

</mosaic_0001>

<llo_original>
// kernel: tpu_custom_call.1
$region0: #{tpu_custom_call.1}
  #allocation0 [shape = 'u32[]', space=smem, size = 0x4, offset = 0x4, fixed_abs, tag = 'smem constant byte address 0x4 - core index']
  #allocation1 [shape = 'u32[144,128]{1,0:T(1,128)}', space=vmem, size = 0x12000, scoped, tag = 'internal scratch']
  %s0 = inlined_call_operand.hbm [shape: f32[8,256], index: 0, kind: input, shape index: {}]
  %s1 = inlined_call_operand.vmem [shape: f32[8,2], index: 1, kind: output, shape index: {}]
  %s2 = sld [smem:[#allocation0]]
  $region18: #{tpu_custom_call.1} parent=0
    _
  %s4 = ssub.s32 1, %s2
  %s5 = scalar_select 0, %s4, %s2
  $region1: #{tpu_custom_call.1} parent=0
    #allocation2 [shape = 'u8[8192]{0}', space=vmem, size = 0x2000, scoped, tag = 'input window, operand 0, single buffered']
    #allocation3 [shape = 's32[1]{0}', space=sflag, size = 0x4, scoped, tag = 'scoped memory for tpu_custom_call.1']
    %6 = vsyncpa [#allocation3], 0
    // Predicated region
    $region2: #{tpu_custom_call.1} parent=1 // pred_check
      _
    $region3: #{tpu_custom_call.1} parent=1 // pred_check_branch
      %8 = sbr.rel (0) target = $region5
    $region4: #{tpu_custom_call.1} parent=1 // pred_region
      %s10 = ssub.s32 256, 256
      %11 = vsyncadd [#allocation3], %s10
      %s13 = sshll.u32 [#allocation2], 4
      %s14 = int_to_ptr.vmem [resolvable:$true] %s13
      %16 = dma.hbm_to_vmem [thread:$0]  %s0, 256, %s14, [#allocation3]
    $region5: #{tpu_custom_call.1} parent=1 // pred_fallthru
      _
    // Predicated region
    $region6: #{tpu_custom_call.1} parent=1 // pred_check
      _
    $region7: #{tpu_custom_call.1} parent=1 // pred_check_branch
      %18 = sbr.rel (0) target = $region9
    $region8: #{tpu_custom_call.1} parent=1 // pred_region
      %19 = dma.done [#allocation3], 256
    $region9: #{tpu_custom_call.1} parent=1 // pred_fallthru
      _
    %v20 = vld [vmem:[#allocation2] sm:$0xff]
    %v21 = vld [vmem:[#allocation2 + $0x8] sm:$0xff]
    %v22 = vmax.f32 %v20, %v21
    %23 = vmax.xlane.f32.xlu0 %v22
    %v24 = vpop.xlane.xlu0 %23
    %v25 = vadd.f32 %v20, %v21
    %26 = vadd.xlane.f32.xlu0 %v25
    %v27 = vpop.xlane.xlu0 %26
    %v28 = vmul.f32 %v27, 0.00390625
    %vm29 = vcmask 7168
    %v30 = vsel %vm29, %v24, %v28
    %vm31 = vcmask 15360
    %32 = vst.msk [vmem:[%s1] sm:$0xff] %vm31, %v30
    // Predicated region
    $region10: #{tpu_custom_call.1} parent=1 // pred_check
      _
    $region11: #{tpu_custom_call.1} parent=1 // pred_check_branch
      %34 = sbr.rel (0) target = $region13
    $region12: #{tpu_custom_call.1} parent=1 // pred_region
      _
    $region13: #{tpu_custom_call.1} parent=1 // pred_fallthru
      _
    // Predicated region
    $region14: #{tpu_custom_call.1} parent=1 // pred_check
      _
    $region15: #{tpu_custom_call.1} parent=1 // pred_check_branch
      %36 = sbr.rel (0) target = $region17
    $region16: #{tpu_custom_call.1} parent=1 // pred_region
      _
    $region17: #{tpu_custom_call.1} parent=1 // pred_fallthru
      _
    %37 = vsyncpa [#allocation3], 1

</llo_original>
